<compile_context>
chip_gen: v5e
topology: v5e:2x2
jax: 0.10.0
libtpu: 0.0.40
codegen_flags: <defaults>
</compile_context>

<pallas_src>
import functools

import jax
import jax.numpy as jnp
from jax import lax
from jax.experimental import pallas as pl
from jax.experimental.pallas import tpu as pltpu

_INT32_MIN = -(2 ** 31)


def _topk_kernel(x_ref, o_ref, *, k, post_act, use_packed_key, unroll):
    x_in = x_ref[...]
    tb, d = x_in.shape

    # torch.topk orders NaN as the largest value: remap for selection only
    # (the stored output below still keeps the original element of x).
    x_sel = jnp.where(jnp.isnan(x_in), jnp.array(jnp.inf, x_in.dtype), x_in)

    col = lax.broadcasted_iota(jnp.int32, (tb, d), 1)  # hoisted (no iota CSE)
    sel0 = col < 0                                     # all-false boolean tile

    if use_packed_key:
        # bf16 path: ONE XLU reduce per selection round.
        # Widen exactly to f32 (low 16 mantissa bits are zero for bf16), view the
        # bits as int32 and apply the standard monotone-sortable transform; then
        # pack the inverted column index into the free low 16 bits so keys are
        # unique and max() breaks value ties toward the smallest index.
        fbits = pltpu.bitcast(x_sel.astype(jnp.float32), jnp.int32)
        skey = fbits ^ jnp.where(fbits < 0, 0x7FFFFFFF, 0)
        key0 = (skey & ~0xFFFF) | (0xFFFF - col)       # > INT32_MIN for D <= 65535

        def body(_, carry):
            key, sel = carry
            maxkey = jnp.max(key, axis=1, keepdims=True)     # XLU
            picked = key == maxkey                           # exact one-hot
            sel = jnp.logical_or(sel, picked)
            key = jnp.where(picked, _INT32_MIN, key)         # retire column
            return key, sel

        _, sel = lax.fori_loop(0, k, body, (key0, sel0), unroll=unroll)
    else:
        # Generic exact path (f32, f16, or bf16 with D > 65535): two XLU reduces
        # per round.  Work copy is f32 (exact widening; avoids sub-32-bit VALU
        # emulation on v5e).
        work0 = x_sel.astype(jnp.float32)
        neg_inf = jnp.array(-jnp.inf, jnp.float32)

        def body(_, carry):
            work, sel = carry
            m = jnp.max(work, axis=1, keepdims=True)                          # XLU
            is_max = jnp.logical_and(work == m, jnp.logical_not(sel))
            first = jnp.min(jnp.where(is_max, col, d), axis=1, keepdims=True)  # XLU
            picked = col == first
            sel = jnp.logical_or(sel, picked)
            work = jnp.where(picked, neg_inf, work)
            return work, sel

        _, sel = lax.fori_loop(0, k, body, (work0, sel0), unroll=unroll)

    # TODO(synk): for k >= ~32 switch to a per-row bisection over the packed key
    # (O(32) passes instead of O(k)) followed by a single threshold-select pass.

    out = jnp.where(sel, x_in, jnp.zeros((), x_in.dtype))
    if post_act is not None:
        out = post_act(out)
    o_ref[...] = out.astype(o_ref.dtype)


def _round_up(a, b):
    return -(-a // b) * b


def _row_align(dtype):
    itemsize = jnp.dtype(dtype).itemsize
    return {4: 8, 2: 16, 1: 32}.get(itemsize, 8)


@functools.lru_cache(maxsize=1)
def _physical_vmem_bytes():
    try:
        info = pltpu.get_tpu_info()
        return int(getattr(info, "vmem_capacity_bytes", 128 * 1024 * 1024))
    except Exception:
        return 128 * 1024 * 1024


def _choose_tiling(B, D, dtype, step_budget):
    """Batch tile: sublane-aligned, VMEM-sized, and >= 2 grid steps when possible."""
    align = _row_align(dtype)
    itemsize = jnp.dtype(dtype).itemsize
    Bp = _round_up(B, align)
    # Live bytes per row per grid step: double-buffered in/out tiles (4 x itemsize)
    # plus in-kernel temps (key/work int32-f32, col iota, x_in, boolean masks).
    per_row = D * (4 * itemsize + 4 + 4 + itemsize + 4)
    cap = max(align, (step_budget // max(per_row, 1)) // align * align)
    nsteps = max(1, -(-Bp // cap))
    if Bp >= 2 * align:
        # Keep >= 2 grid steps so dimension_semantics=("parallel",) can shard the
        # axis across v7x's two TensorCores (negligible cost on 1-TC chips).
        nsteps = max(nsteps, 2)
    block_rows = min(Bp, _round_up(-(-Bp // nsteps), align))
    Bp = _round_up(Bp, block_rows)
    return block_rows, Bp


def topk_pallas(x, k, post_act=None, block_rows=None, vmem_limit_bytes=None):
    """TopK along dim=1 of a (B, D) float array, keeping the original values."""
    B, D = x.shape
    k = int(k)
    assert 1 <= k <= D, "k must be in [1, D]"
    assert jnp.issubdtype(x.dtype, jnp.floating), "TopK expects a float input"

    small_vmem = _physical_vmem_bytes() <= 64 * 1024 * 1024   # v7x-class TC
    step_budget = (14 if small_vmem else 28) * 1024 * 1024
    if vmem_limit_bytes is None:
        vmem_limit_bytes = (32 if small_vmem else 48) * 1024 * 1024

    align = _row_align(x.dtype)
    if block_rows is None:
        block_rows, Bp = _choose_tiling(B, D, x.dtype, step_budget)
    else:
        assert block_rows % align == 0 or block_rows >= B, \
            "block_rows must be sublane-aligned (or cover the whole batch)"
        Bp = _round_up(B, block_rows)

    # Pad only the batch dim (dummy rows, sliced off below).  The feature dim is
    # never padded: the BlockSpec uses the full D, so a ragged feature dim only
    # costs a masked store on the tail vreg instead of two full HBM copies.
    xp = x if Bp == B else jnp.pad(x, ((0, Bp - B), (0, 0)))

    use_packed_key = (x.dtype == jnp.bfloat16) and D <= 65535
    unroll = True if k <= 8 else 4   # cap code size / live ranges for large k

    kernel = functools.partial(_topk_kernel, k=k, post_act=post_act,
                               use_packed_key=use_packed_key, unroll=unroll)

    out = pl.pallas_call(
        kernel,
        out_shape=jax.ShapeDtypeStruct((Bp, D), x.dtype),
        grid_spec=pltpu.PrefetchScalarGridSpec(
            num_scalar_prefetch=0,
            grid=(Bp // block_rows,),
            in_specs=[pl.BlockSpec((block_rows, D), lambda i: (i, 0))],
            out_specs=pl.BlockSpec((block_rows, D), lambda i: (i, 0)),
        ),
        compiler_params=pltpu.CompilerParams(
            dimension_semantics=("parallel",),
            vmem_limit_bytes=vmem_limit_bytes,
        ),
    )(xp)

    if Bp != B:
        out = out[:B]
    return out


if __name__ == "__main__":
    key = jax.random.PRNGKey(0)
    k1, k2 = jax.random.split(key)

    # f32 case (generic two-reduce path): batch=8, dict features=32, k=4.
    B, D, K = 8, 32, 4
    x = jax.random.normal(k1, (B, D), dtype=jnp.float32)
    out = jax.block_until_ready(topk_pallas(x, K))  # post_act=None, module default
    nz = (out != 0).sum(axis=1)
    ref_vals = -jnp.sort(-x, axis=1)[:, :K]
    got_vals = -jnp.sort(-out, axis=1)[:, :K]
    assert bool(jnp.all(nz == K)), "f32: wrong number of kept elements"
    assert bool(jnp.all((out == 0) | (out == x))), "f32: kept values were altered"
    assert bool(jnp.allclose(ref_vals, got_vals)), "f32: kept values differ from top-k"

    # bf16 case (packed-key single-reduce path) with a ragged feature dim (no pad).
    B2, D2, K2 = 16, 160, 5
    x2 = jax.random.normal(k2, (B2, D2), dtype=jnp.bfloat16)
    out2 = jax.block_until_ready(topk_pallas(x2, K2))
    nz2 = (out2 != 0).sum(axis=1)
    ref2 = -jnp.sort(-x2.astype(jnp.float32), axis=1)[:, :K2]
    got2 = -jnp.sort(-out2.astype(jnp.float32), axis=1)[:, :K2]
    assert bool(jnp.all(nz2 == K2)), "bf16: wrong number of kept elements"
    assert bool(jnp.all((out2 == 0) | (out2 == x2))), "bf16: kept values were altered"
    assert bool(jnp.allclose(ref2, got2)), "bf16: kept values differ from top-k"

    print("KERNEL_OK")
</pallas_src>

<mosaic_0001>
module attributes {stable_mosaic.version = 11 : i64} {
  func.func @_topk_kernel(%arg0: i32, %arg1: memref<8x32xf32, #tpu.memory_space<vmem>>, %arg2: memref<8x32xf32, #tpu.memory_space<vmem>>) attributes {dimension_semantics = [#tpu.dimension_semantics<parallel>], iteration_bounds = array<i64: 1>, scalar_prefetch = 0 : i64, scratch_operands = 0 : i64, tpu.core_type = #tpu.core_type<tc>, window_params = [{transform_indices = @transform_0, window_bounds = array<i64: 8, 32>}, {transform_indices = @transform_1, window_bounds = array<i64: 8, 32>}]} {
    %c0 = arith.constant 0 : index
    %c0_0 = arith.constant 0 : index
    %0 = vector.load %arg1[%c0, %c0_0] : memref<8x32xf32, #tpu.memory_space<vmem>>, vector<8x32xf32>
    %1 = arith.cmpf one, %0, %0 : vector<8x32xf32>
    %cst = arith.constant 0x7F800000 : f32
    %2 = vector.broadcast %cst : f32 to vector<8x32xf32>
    %3 = arith.select %1, %2, %0 : vector<8x32xi1>, vector<8x32xf32>
    %4 = tpu.iota {dimensions = array<i32: 1>} : vector<8x32xi32>
    %c0_i32 = arith.constant 0 : i32
    %5 = vector.broadcast %c0_i32 : i32 to vector<8x32xi32>
    %6 = arith.cmpi slt, %4, %5 : vector<8x32xi32>
    %cst_1 = arith.constant 0xFF800000 : f32
    %c0_i32_2 = arith.constant 0 : i32
    %cst_3 = arith.constant dense<0xFF800000> : vector<8xf32>
    %7 = vector.multi_reduction <maximumf>, %3, %cst_3 [1] : vector<8x32xf32> to vector<8xf32>
    %8 = vector.shape_cast %7 : vector<8xf32> to vector<8x1xf32>
    %9 = vector.broadcast %8 : vector<8x1xf32> to vector<8x32xf32>
    %10 = arith.cmpf oeq, %3, %9 : vector<8x32xf32>
    %cst_4 = arith.constant dense<true> : vector<8x32xi1>
    %11 = arith.xori %6, %cst_4 : vector<8x32xi1>
    %12 = arith.andi %10, %11 : vector<8x32xi1>
    %c32_i32 = arith.constant 32 : i32
    %13 = vector.broadcast %c32_i32 : i32 to vector<8x32xi32>
    %14 = arith.select %12, %4, %13 : vector<8x32xi1>, vector<8x32xi32>
    %cst_5 = arith.constant dense<2147483647> : vector<8xi32>
    %15 = vector.multi_reduction <minsi>, %14, %cst_5 [1] : vector<8x32xi32> to vector<8xi32>
    %16 = vector.shape_cast %15 : vector<8xi32> to vector<8x1xi32>
    %17 = vector.broadcast %16 : vector<8x1xi32> to vector<8x32xi32>
    %18 = arith.cmpi eq, %4, %17 : vector<8x32xi32>
    %19 = arith.ori %6, %18 : vector<8x32xi1>
    %20 = vector.broadcast %cst_1 : f32 to vector<8x32xf32>
    %21 = arith.select %18, %20, %3 : vector<8x32xi1>, vector<8x32xf32>
    %c1_i32 = arith.constant 1 : i32
    %cst_6 = arith.constant dense<0xFF800000> : vector<8xf32>
    %22 = vector.multi_reduction <maximumf>, %21, %cst_6 [1] : vector<8x32xf32> to vector<8xf32>
    %23 = vector.shape_cast %22 : vector<8xf32> to vector<8x1xf32>
    %24 = vector.broadcast %23 : vector<8x1xf32> to vector<8x32xf32>
    %25 = arith.cmpf oeq, %21, %24 : vector<8x32xf32>
    %cst_7 = arith.constant dense<true> : vector<8x32xi1>
    %26 = arith.xori %19, %cst_7 : vector<8x32xi1>
    %27 = arith.andi %25, %26 : vector<8x32xi1>
    %c32_i32_8 = arith.constant 32 : i32
    %28 = vector.broadcast %c32_i32_8 : i32 to vector<8x32xi32>
    %29 = arith.select %27, %4, %28 : vector<8x32xi1>, vector<8x32xi32>
    %cst_9 = arith.constant dense<2147483647> : vector<8xi32>
    %30 = vector.multi_reduction <minsi>, %29, %cst_9 [1] : vector<8x32xi32> to vector<8xi32>
    %31 = vector.shape_cast %30 : vector<8xi32> to vector<8x1xi32>
    %32 = vector.broadcast %31 : vector<8x1xi32> to vector<8x32xi32>
    %33 = arith.cmpi eq, %4, %32 : vector<8x32xi32>
    %34 = arith.ori %19, %33 : vector<8x32xi1>
    %35 = vector.broadcast %cst_1 : f32 to vector<8x32xf32>
    %36 = arith.select %33, %35, %21 : vector<8x32xi1>, vector<8x32xf32>
    %c2_i32 = arith.constant 2 : i32
    %cst_10 = arith.constant dense<0xFF800000> : vector<8xf32>
    %37 = vector.multi_reduction <maximumf>, %36, %cst_10 [1] : vector<8x32xf32> to vector<8xf32>
    %38 = vector.shape_cast %37 : vector<8xf32> to vector<8x1xf32>
    %39 = vector.broadcast %38 : vector<8x1xf32> to vector<8x32xf32>
    %40 = arith.cmpf oeq, %36, %39 : vector<8x32xf32>
    %cst_11 = arith.constant dense<true> : vector<8x32xi1>
    %41 = arith.xori %34, %cst_11 : vector<8x32xi1>
    %42 = arith.andi %40, %41 : vector<8x32xi1>
    %c32_i32_12 = arith.constant 32 : i32
    %43 = vector.broadcast %c32_i32_12 : i32 to vector<8x32xi32>
    %44 = arith.select %42, %4, %43 : vector<8x32xi1>, vector<8x32xi32>
    %cst_13 = arith.constant dense<2147483647> : vector<8xi32>
    %45 = vector.multi_reduction <minsi>, %44, %cst_13 [1] : vector<8x32xi32> to vector<8xi32>
    %46 = vector.shape_cast %45 : vector<8xi32> to vector<8x1xi32>
    %47 = vector.broadcast %46 : vector<8x1xi32> to vector<8x32xi32>
    %48 = arith.cmpi eq, %4, %47 : vector<8x32xi32>
    %49 = arith.ori %34, %48 : vector<8x32xi1>
    %50 = vector.broadcast %cst_1 : f32 to vector<8x32xf32>
    %51 = arith.select %48, %50, %36 : vector<8x32xi1>, vector<8x32xf32>
    %c3_i32 = arith.constant 3 : i32
    %cst_14 = arith.constant dense<0xFF800000> : vector<8xf32>
    %52 = vector.multi_reduction <maximumf>, %51, %cst_14 [1] : vector<8x32xf32> to vector<8xf32>
    %53 = vector.shape_cast %52 : vector<8xf32> to vector<8x1xf32>
    %54 = vector.broadcast %53 : vector<8x1xf32> to vector<8x32xf32>
    %55 = arith.cmpf oeq, %51, %54 : vector<8x32xf32>
    %cst_15 = arith.constant dense<true> : vector<8x32xi1>
    %56 = arith.xori %49, %cst_15 : vector<8x32xi1>
    %57 = arith.andi %55, %56 : vector<8x32xi1>
    %c32_i32_16 = arith.constant 32 : i32
    %58 = vector.broadcast %c32_i32_16 : i32 to vector<8x32xi32>
    %59 = arith.select %57, %4, %58 : vector<8x32xi1>, vector<8x32xi32>
    %cst_17 = arith.constant dense<2147483647> : vector<8xi32>
    %60 = vector.multi_reduction <minsi>, %59, %cst_17 [1] : vector<8x32xi32> to vector<8xi32>
    %61 = vector.shape_cast %60 : vector<8xi32> to vector<8x1xi32>
    %62 = vector.broadcast %61 : vector<8x1xi32> to vector<8x32xi32>
    %63 = arith.cmpi eq, %4, %62 : vector<8x32xi32>
    %64 = arith.ori %49, %63 : vector<8x32xi1>
    %65 = vector.broadcast %cst_1 : f32 to vector<8x32xf32>
    %66 = arith.select %63, %65, %51 : vector<8x32xi1>, vector<8x32xf32>
    %cst_18 = arith.constant 0.000000e+00 : f32
    %67 = vector.broadcast %cst_18 : f32 to vector<8x32xf32>
    %68 = arith.select %64, %0, %67 : vector<8x32xi1>, vector<8x32xf32>
    %c0_19 = arith.constant 0 : index
    %c0_20 = arith.constant 0 : index
    %69 = vector.load %arg2[%c0_19, %c0_20] : memref<8x32xf32, #tpu.memory_space<vmem>>, vector<8x32xf32>
    tpu.vector_store %arg2[%c0_19, %c0_20], %68 {strides = array<i32>} : memref<8x32xf32, #tpu.memory_space<vmem>>, vector<8x32xf32>,
    return
  }
  func.func @transform_0(%arg0: i32) -> (i32, i32) {
    %c0_i32 = arith.constant 0 : i32
    %c0_i32_0 = arith.constant 0 : i32
    return %arg0, %c0_i32 : i32, i32
  }
  func.func @transform_1(%arg0: i32) -> (i32, i32) {
    %c0_i32 = arith.constant 0 : i32
    %c0_i32_0 = arith.constant 0 : i32
    return %arg0, %c0_i32 : i32, i32
  }
}

</mosaic_0001>

<llo_original>
// kernel: tpu_custom_call.1
$region0: #{tpu_custom_call.1}
  #allocation0 [shape = 'u32[]', space=smem, size = 0x4, offset = 0x4, fixed_abs, tag = 'smem constant byte address 0x4 - core index']
  #allocation1 [shape = 'u32[72,128]{1,0:T(1,128)}', space=vmem, size = 0x9000, scoped, tag = 'internal scratch']
  %s0 = inlined_call_operand.hbm [shape: f32[8,32], index: 0, kind: input, shape index: {}]
  %s1 = inlined_call_operand.hbm [shape: f32[8,32], index: 1, kind: output, shape index: {}]
  %s2 = sld [smem:[#allocation0]]
  $region18: #{tpu_custom_call.1} parent=0
    _
  %s4 = ssub.s32 1, %s2
  %s5 = scalar_select 0, %s4, %s2
  $region1: #{tpu_custom_call.1} parent=0
    #allocation2 [shape = 'u8[4096]{0}', space=vmem, size = 0x1000, scoped, tag = 'input window, operand 0, single buffered']
    #allocation3 [shape = 's32[1]{0}', space=sflag, size = 0x4, scoped, tag = 'scoped memory for tpu_custom_call.1']
    #allocation4 [shape = 's32[1]{0}', space=sflag, size = 0x4, scoped, tag = 'scoped memory for tpu_custom_call.1']
    #allocation5 [shape = 'u8[4096]{0}', space=vmem, size = 0x1000, scoped, tag = 'output window, operand 0, single buffered']
    %6 = vsyncpa [#allocation3], 0
    %7 = vsyncpa [#allocation4], 0
    // Predicated region
    $region2: #{tpu_custom_call.1} parent=1 // pred_check
      _
    $region3: #{tpu_custom_call.1} parent=1 // pred_check_branch
      %9 = sbr.rel (0) target = $region5
    $region4: #{tpu_custom_call.1} parent=1 // pred_region
      %11 = vsyncadd [#allocation3], 0
      %s13 = sshll.u32 %s0, 4
      %s14 = int_to_ptr.hbm [resolvable:$true] %s13
      %s15 = sshll.u32 [#allocation2], 4
      %s16 = int_to_ptr.vmem [resolvable:$true] %s15
      %18 = dma.hbm_to_vmem [thread:$0]  %s14, 128, %s16, [#allocation3]
    $region5: #{tpu_custom_call.1} parent=1 // pred_fallthru
      _
    // Predicated region
    $region6: #{tpu_custom_call.1} parent=1 // pred_check
      _
    $region7: #{tpu_custom_call.1} parent=1 // pred_check_branch
      %20 = sbr.rel (0) target = $region9
    $region8: #{tpu_custom_call.1} parent=1 // pred_region
      %22 = dma.done [#allocation3], 128
    $region9: #{tpu_custom_call.1} parent=1 // pred_fallthru
      _
    %v23 = vld [vmem:[#allocation2] sm:$0xff]
    %vm24 = vcmp.ne.f32.partialorder %v23, %v23
    %v25 = vsel %vm24, inf, %v23
    %v26 = vlaneseq
    %v27 = vand.u32 %v26, 127
    %vm28 = vcmp.lt.s32.totalorder %v27, 0
    %vm29 = vcmask 261120
    %v30 = vsel %vm29, %v25, -inf
    %31 = vmax.xlane.f32.xlu0 %v30
    %v32 = vpop.xlane.xlu0 %31
    %vm33 = vcmp.eq.f32.partialorder %v25, %v32
    %vm34 = vmxor %vm28, 1
    %vm35 = vmand %vm33, %vm34
    %v36 = vsel %vm35, %v27, 32
    %v37 = vsel %vm29, %v36, 2147483647
    %v38 = vand.u32 %v37, 65535
    %v39 = vshra.s32 %v37, 16
    %v40 = vcvt.s32.f32 %v38
    %v41 = vcvt.s32.f32 %v39
    %42 = vmin.xlane.f32.xlu0 %v41
    %v43 = vpop.xlane.xlu0 %42
    %vm44 = vcmp.eq.f32.partialorder %v41, %v43
    %v45 = vsel %vm44, %v40, inf
    %46 = vmin.xlane.f32.xlu0 %v45
    %v47 = vpop.xlane.xlu0 %46
    %v48 = vcvt.f32.s32 %v47
    %v49 = vcvt.f32.s32 %v43
    %v50 = vshll.u32 %v49, 16
    %v51 = vadd.s32 %v50, %v48
    %vm52 = vcmp.eq.s32.totalorder %v27, %v51
    %vm53 = vmor %vm28, %vm52
    %v54 = vsel %vm52, -inf, %v25
    %v55 = vsel %vm29, %v54, -inf
    %56 = vmax.xlane.f32.xlu0 %v55
    %v57 = vpop.xlane.xlu0 %56
    %vm58 = vcmp.eq.f32.partialorder %v54, %v57
    %vm59 = vmxor %vm53, 1
    %vm60 = vmand %vm58, %vm59
    %v61 = vsel %vm60, %v27, 32
    %v62 = vsel %vm29, %v61, 2147483647
    %v63 = vand.u32 %v62, 65535
    %v64 = vshra.s32 %v62, 16
    %v65 = vcvt.s32.f32 %v63
    %v66 = vcvt.s32.f32 %v64
    %67 = vmin.xlane.f32.xlu0 %v66
    %v68 = vpop.xlane.xlu0 %67
    %vm69 = vcmp.eq.f32.partialorder %v66, %v68
    %v70 = vsel %vm69, %v65, inf
    %71 = vmin.xlane.f32.xlu0 %v70
    %v72 = vpop.xlane.xlu0 %71
    %v73 = vcvt.f32.s32 %v72
    %v74 = vcvt.f32.s32 %v68
    %v75 = vshll.u32 %v74, 16
    %v76 = vadd.s32 %v75, %v73
    %vm77 = vcmp.eq.s32.totalorder %v27, %v76
    %vm78 = vmor %vm53, %vm77
    %v79 = vsel %vm77, -inf, %v54
    %v80 = vsel %vm29, %v79, -inf
    %81 = vmax.xlane.f32.xlu0 %v80
    %v82 = vpop.xlane.xlu0 %81
    %vm83 = vcmp.eq.f32.partialorder %v79, %v82
    %vm84 = vmxor %vm78, 1
    %vm85 = vmand %vm83, %vm84
    %v86 = vsel %vm85, %v27, 32
    %v87 = vsel %vm29, %v86, 2147483647
    %v88 = vand.u32 %v87, 65535
    %v89 = vshra.s32 %v87, 16
    %v90 = vcvt.s32.f32 %v88
    %v91 = vcvt.s32.f32 %v89
    %92 = vmin.xlane.f32.xlu0 %v91
    %v93 = vpop.xlane.xlu0 %92
    %vm94 = vcmp.eq.f32.partialorder %v91, %v93
    %v95 = vsel %vm94, %v90, inf
    %96 = vmin.xlane.f32.xlu0 %v95
    %v97 = vpop.xlane.xlu0 %96
    %v98 = vcvt.f32.s32 %v97
    %v99 = vcvt.f32.s32 %v93
    %v100 = vshll.u32 %v99, 16
    %v101 = vadd.s32 %v100, %v98
    %vm102 = vcmp.eq.s32.totalorder %v27, %v101
    %vm103 = vmor %vm78, %vm102
    %v104 = vsel %vm102, -inf, %v79
    %v105 = vsel %vm29, %v104, -inf
    %106 = vmax.xlane.f32.xlu0 %v105
    %v107 = vpop.xlane.xlu0 %106
    %vm108 = vcmp.eq.f32.partialorder %v104, %v107
    %vm109 = vmxor %vm103, 1
    %vm110 = vmand %vm108, %vm109
    %v111 = vsel %vm110, %v27, 32
    %v112 = vsel %vm29, %v111, 2147483647
    %v113 = vand.u32 %v112, 65535
    %v114 = vshra.s32 %v112, 16
    %v115 = vcvt.s32.f32 %v113
    %v116 = vcvt.s32.f32 %v114
    %117 = vmin.xlane.f32.xlu0 %v116
    %v118 = vpop.xlane.xlu0 %117
    %vm119 = vcmp.eq.f32.partialorder %v116, %v118
    %v120 = vsel %vm119, %v115, inf
    %121 = vmin.xlane.f32.xlu0 %v120
    %v122 = vpop.xlane.xlu0 %121
    %v123 = vcvt.f32.s32 %v122
    %v124 = vcvt.f32.s32 %v118
    %v125 = vshll.u32 %v124, 16
    %v126 = vadd.s32 %v125, %v123
    %vm127 = vcmp.eq.s32.totalorder %v27, %v126
    %vm128 = vmor %vm103, %vm127
    %v129 = vsel %vm128, %v23, 0.0
    %130 = vst.msk [vmem:[#allocation5] sm:$0xff] %vm29, %v129
    // Predicated region
    $region10: #{tpu_custom_call.1} parent=1 // pred_check
      _
    $region11: #{tpu_custom_call.1} parent=1 // pred_check_branch
      %132 = sbr.rel (0) target = $region13
    $region12: #{tpu_custom_call.1} parent=1 // pred_region
      %134 = vsyncadd [#allocation4], 0
      %s136 = sshll.u32 [#allocation5], 4
      %s137 = int_to_ptr.vmem [resolvable:$true] %s136
      %s138 = sshll.u32 %s1, 4
      %s139 = int_to_ptr.hbm [resolvable:$true] %s138
      %141 = dma.vmem_to_hbm [thread:$0]  %s137, 128, %s139, [#allocation4]
    $region13: #{tpu_custom_call.1} parent=1 // pred_fallthru
      _
    // Predicated region
    $region14: #{tpu_custom_call.1} parent=1 // pred_check
      _
    $region15: #{tpu_custom_call.1} parent=1 // pred_check_branch
      %143 = sbr.rel (0) target = $region17
    $region16: #{tpu_custom_call.1} parent=1 // pred_region
      %145 = dma.done [#allocation4], 128
    $region17: #{tpu_custom_call.1} parent=1 // pred_fallthru
      _
    %146 = vsyncpa [#allocation3], 1
    %147 = vsyncpa [#allocation4], 1

</llo_original>
